<compile_context>
chip_gen: v5e
topology: v5e:2x2
jax: 0.10.0
libtpu: 0.0.40
codegen_flags: <defaults>
</compile_context>

<pallas_src>
import jax
import jax.numpy as jnp
from jax.experimental import pallas as pl
from jax.experimental.pallas import tpu as pltpu

NP = 128      # padded lane width of the head output (11 real logits)
N_LOGITS = 11


def _round_up(x, m):
    return ((x + m - 1) // m) * m


# ---------------------------------------------------------------------------
# Fused kernel
# ---------------------------------------------------------------------------
def make_fused_kernel(inv_s, cp):
    def kernel(p_ref, w_ref, b_ref, hw_ref, hb_ref, o_ref, sum_acc, max_acc):
        s_idx = pl.program_id(1)

        @pl.when(s_idx == 0)
        def _init():
            sum_acc[...] = jnp.zeros_like(sum_acc)
            max_acc[...] = jnp.full_like(max_acc, -jnp.inf)

        # Conv as matmul on the MXU: bf16 operands, f32 accumulation.
        feat = jnp.dot(p_ref[0], w_ref[...],
                       preferred_element_type=jnp.float32)        # (TM, CP) f32
        feat = jnp.maximum(feat + b_ref[...], 0.0)                 # f32 epilogue

        # Partial concat pooling: running sum (-> mean) and running max,
        # accumulated across spatial grid steps in VMEM scratch.
        sum_acc[...] += jnp.sum(feat, axis=0, keepdims=True)
        max_acc[...] = jnp.maximum(max_acc[...],
                                   jnp.max(feat, axis=0, keepdims=True))

        # Finalize on the last spatial tile: mean, then fused head matmul
        # against all 5 stacked heads (avg block then max block, matching
        # torch.cat([avg, max], dim=-1)).  Output is 128 lanes -> unmasked vst.
        @pl.when(s_idx == pl.num_programs(1) - 1)
        def _finalize():
            avg = sum_acc[...] * inv_s                              # (1, CP)
            mx = max_acc[...]                                       # (1, CP)
            logits = (
                jnp.dot(avg, hw_ref[0:cp, :],
                        preferred_element_type=jnp.float32)
                + jnp.dot(mx, hw_ref[cp:2 * cp, :],
                          preferred_element_type=jnp.float32)
                + hb_ref[...]
            )                                                       # (1, NP)
            o_ref[0] = logits

    return kernel


# ---------------------------------------------------------------------------
# Wrapper
# ---------------------------------------------------------------------------
def im2col(x, k=3, pad=1):
    """x: [B, C, H, W] -> patches [B, H*W, C*k*k] (matches OIHW weight reshape)."""
    B, C, H, W = x.shape
    xp = jnp.pad(x, ((0, 0), (0, 0), (pad, pad), (pad, pad)))
    cols = []
    for dh in range(k):
        for dw in range(k):
            cols.append(xp[:, :, dh:dh + H, dw:dw + W])             # [B, C, H, W]
    patches = jnp.stack(cols, axis=2)                               # [B, C, kk, H, W]
    patches = patches.transpose(0, 3, 4, 1, 2)                      # [B, H, W, C, kk]
    return patches.reshape(B, H * W, C * k * k)


def model_forward(x, params, tm=128):
    """x: [B, C_in, H, W] (NCHW).  Returns (bowel, extrav, kidney, liver, spleen)."""
    conv_w, conv_b = params["conv_w"], params["conv_b"]
    head_w, head_b = params["head_w"], params["head_b"]

    B, C_in, H, W = x.shape
    C_feat, _, k, _ = conv_w.shape
    S = H * W
    K = C_in * k * k
    KP = _round_up(K, 8)                  # pad contraction dim to sublane multiple
    CP = _round_up(C_feat, 128)           # pad channels to a lane-dense multiple

    # Spatial row tile.  For large images pick ~512 on v5e/v6e and ~256 on
    # v7x (64 MiB physical VMEM); the toy case just uses min(tm, S).
    TM = min(tm, S)
    assert S % TM == 0, "spatial size must be divisible by the tile size"
    n_s = S // TM

    # --- host-side operand prep (cheap XLA ops) -----------------------------
    patches = im2col(x, k=k, pad=1)                                 # [B, S, K] f32
    patches = jnp.pad(patches, ((0, 0), (0, 0), (0, KP - K)))
    patches = patches.astype(jnp.bfloat16)                          # bf16 MXU operand

    w_mat = conv_w.reshape(C_feat, K).T                             # [K, C_feat]
    w_mat = jnp.pad(w_mat, ((0, KP - K), (0, CP - C_feat)))
    w_mat = w_mat.astype(jnp.bfloat16)                              # [KP, CP] bf16

    b_mat = jnp.pad(conv_b.reshape(1, C_feat),
                    ((0, 0), (0, CP - C_feat))).astype(jnp.float32)  # [1, CP]

    # Head weights: rows [0:C_feat) consume the avg block, rows [CP:CP+C_feat)
    # the max block (torch concat order: avg then max).  Padded to 128 lanes.
    hw = jnp.zeros((2 * CP, NP), jnp.float32)
    hw = hw.at[:C_feat, :N_LOGITS].set(head_w[:, :C_feat].T)
    hw = hw.at[CP:CP + C_feat, :N_LOGITS].set(head_w[:, C_feat:].T)
    hb = jnp.pad(head_b.reshape(1, N_LOGITS),
                 ((0, 0), (0, NP - N_LOGITS))).astype(jnp.float32)   # [1, NP]

    grid_spec = pltpu.PrefetchScalarGridSpec(
        num_scalar_prefetch=0,
        grid=(B, n_s),
        in_specs=[
            pl.BlockSpec((1, TM, KP), lambda b, s: (b, s, 0)),       # patches tile
            pl.BlockSpec((KP, CP), lambda b, s: (0, 0)),             # conv W (resident)
            pl.BlockSpec((1, CP), lambda b, s: (0, 0)),              # conv bias
            pl.BlockSpec((2 * CP, NP), lambda b, s: (0, 0)),         # head W (resident)
            pl.BlockSpec((1, NP), lambda b, s: (0, 0)),              # head bias
        ],
        out_specs=pl.BlockSpec((1, 1, NP), lambda b, s: (b, 0, 0)),  # per-batch logits
        scratch_shapes=[
            pltpu.VMEM((1, CP), jnp.float32),                        # running sum
            pltpu.VMEM((1, CP), jnp.float32),                        # running max
        ],
    )

    cost = pl.CostEstimate(
        flops=2 * B * S * KP * CP + 4 * B * CP * NP,
        transcendentals=0,
        bytes_accessed=(patches.size * 2 + w_mat.size * 2 + b_mat.size * 4
                        + hw.size * 4 + hb.size * 4 + B * NP * 4),
    )

    out3 = pl.pallas_call(
        make_fused_kernel(1.0 / S, CP),
        out_shape=jax.ShapeDtypeStruct((B, 1, NP), jnp.float32),
        grid_spec=grid_spec,
        compiler_params=pltpu.CompilerParams(
            dimension_semantics=("parallel", "arbitrary"),
            vmem_limit_bytes=32 * 1024 * 1024,
        ),
        cost_estimate=cost,
    )(patches, w_mat, b_mat, hw, hb)

    logits = out3[:, 0, :N_LOGITS]                                   # [B, 11]
    bowel = logits[:, 0:1]
    extravasation = logits[:, 1:2]
    kidney = logits[:, 2:5]
    liver = logits[:, 5:8]
    spleen = logits[:, 8:11]
    return bowel, extravasation, kidney, liver, spleen


# ---------------------------------------------------------------------------
# Params + pure-JAX reference
# ---------------------------------------------------------------------------
def init_params(key, c_in=4, c_feat=32, k=3):
    k1, k2, k3, k4 = jax.random.split(key, 4)
    conv_w = 0.1 * jax.random.normal(k1, (c_feat, c_in, k, k), jnp.float32)
    conv_b = 0.1 * jax.random.normal(k2, (c_feat,), jnp.float32)
    # 5 heads stacked: bowel(1)+extrav(1)+kidney(3)+liver(3)+spleen(3) = 11
    head_w = 0.1 * jax.random.normal(k3, (N_LOGITS, 2 * c_feat), jnp.float32)
    head_b = 0.1 * jax.random.normal(k4, (N_LOGITS,), jnp.float32)
    return {"conv_w": conv_w, "conv_b": conv_b, "head_w": head_w, "head_b": head_b}


def reference_forward(x, params):
    conv_w, conv_b = params["conv_w"], params["conv_b"]
    head_w, head_b = params["head_w"], params["head_b"]
    feat = jax.lax.conv_general_dilated(
        x, conv_w, window_strides=(1, 1), padding="SAME",
        dimension_numbers=("NCHW", "OIHW", "NCHW"))
    feat = jnp.maximum(feat + conv_b[None, :, None, None], 0.0)
    avg = feat.mean(axis=(2, 3))
    mx = feat.max(axis=(2, 3))
    pooled = jnp.concatenate([avg, mx], axis=-1)
    return pooled @ head_w.T + head_b


if __name__ == "__main__":
    key = jax.random.PRNGKey(0)
    kp, kx = jax.random.split(key)
    params = init_params(kp)

    B, C_in, H, W = 2, 4, 16, 16
    x = jax.random.normal(kx, (B, C_in, H, W), jnp.float32)

    outs = jax.block_until_ready(model_forward(x, params))
    bowel, extrav, kidney, liver, spleen = outs
    assert bowel.shape == (B, 1)
    assert extrav.shape == (B, 1)
    assert kidney.shape == (B, 3)
    assert liver.shape == (B, 3)
    assert spleen.shape == (B, 3)

    # Numerical check against a pure-JAX reference (bf16 MXU operands -> loose tol).
    got = jnp.concatenate(outs, axis=-1)
    ref = reference_forward(x, params)
    assert bool(jnp.allclose(got, ref, atol=2e-2, rtol=2e-2)), (got, ref)

    print("KERNEL_OK")
</pallas_src>

<mosaic_0001>
module attributes {stable_mosaic.version = 11 : i64} {
  func.func @kernel(%arg0: i32, %arg1: i32, %arg2: memref<1x128x40xbf16, #tpu.memory_space<vmem>>, %arg3: memref<40x128xbf16, #tpu.memory_space<vmem>>, %arg4: memref<1x128xf32, #tpu.memory_space<vmem>>, %arg5: memref<256x128xf32, #tpu.memory_space<vmem>>, %arg6: memref<1x128xf32, #tpu.memory_space<vmem>>, %arg7: memref<1x1x128xf32, #tpu.memory_space<vmem>>, %arg8: memref<1x128xf32, #tpu.memory_space<vmem>>, %arg9: memref<1x128xf32, #tpu.memory_space<vmem>>) attributes {dimension_semantics = [#tpu.dimension_semantics<parallel>, #tpu.dimension_semantics<arbitrary>], iteration_bounds = array<i64: 2, 2>, scalar_prefetch = 0 : i64, scratch_operands = 2 : i64, tpu.core_type = #tpu.core_type<tc>, window_params = [{transform_indices = @transform_0, window_bounds = array<i64: 1, 128, 40>}, {pipeline_mode = #tpu.pipeline_mode<synchronous>, transform_indices = @transform_1, window_bounds = array<i64: 40, 128>}, {pipeline_mode = #tpu.pipeline_mode<synchronous>, transform_indices = @transform_2, window_bounds = array<i64: 1, 128>}, {pipeline_mode = #tpu.pipeline_mode<synchronous>, transform_indices = @transform_3, window_bounds = array<i64: 256, 128>}, {pipeline_mode = #tpu.pipeline_mode<synchronous>, transform_indices = @transform_4, window_bounds = array<i64: 1, 128>}, {transform_indices = @transform_5, window_bounds = array<i64: 1, 1, 128>}]} {
    %c0_i32 = arith.constant 0 : i32
    %0 = arith.cmpi eq, %arg1, %c0_i32 : i32
    %1 = arith.extui %0 : i1 to i32
    %c0_i32_0 = arith.constant 0 : i32
    %2 = arith.cmpi ne, %1, %c0_i32_0 : i32
    scf.if %2 {
      %cst_19 = arith.constant 0.000000e+00 : f32
      %25 = vector.broadcast %cst_19 : f32 to vector<1x128xf32>
      %c0_20 = arith.constant 0 : index
      %c0_21 = arith.constant 0 : index
      %26 = vector.load %arg8[%c0_20, %c0_21] : memref<1x128xf32, #tpu.memory_space<vmem>>, vector<1x128xf32>
      tpu.vector_store %arg8[%c0_20, %c0_21], %25 {strides = array<i32>} : memref<1x128xf32, #tpu.memory_space<vmem>>, vector<1x128xf32>,
      %cst_22 = arith.constant 0xFF800000 : f32
      %27 = vector.broadcast %cst_22 : f32 to vector<1x128xf32>
      %c0_23 = arith.constant 0 : index
      %c0_24 = arith.constant 0 : index
      %28 = vector.load %arg9[%c0_23, %c0_24] : memref<1x128xf32, #tpu.memory_space<vmem>>, vector<1x128xf32>
      tpu.vector_store %arg9[%c0_23, %c0_24], %27 {strides = array<i32>} : memref<1x128xf32, #tpu.memory_space<vmem>>, vector<1x128xf32>,
    } else {
    }
    %c0 = arith.constant 0 : index
    %c0_1 = arith.constant 0 : index
    %c0_2 = arith.constant 0 : index
    %3 = vector.load %arg2[%c0, %c0_1, %c0_2] : memref<1x128x40xbf16, #tpu.memory_space<vmem>>, vector<1x128x40xbf16>
    %4 = vector.shape_cast %3 : vector<1x128x40xbf16> to vector<128x40xbf16>
    %c0_3 = arith.constant 0 : index
    %c0_4 = arith.constant 0 : index
    %5 = vector.load %arg3[%c0_3, %c0_4] : memref<40x128xbf16, #tpu.memory_space<vmem>>, vector<40x128xbf16>
    %cst = arith.constant dense<0.000000e+00> : vector<128x128xf32>
    %6 = tpu.matmul %4, %5, %cst {dimension_numbers = #tpu.dot_dimension_numbers<[1], [0], [0], [1], [0, 0, 1, 1], [], []>} : vector<128x40xbf16>, vector<40x128xbf16>, vector<128x128xf32> -> vector<128x128xf32>
    %c0_5 = arith.constant 0 : index
    %c0_6 = arith.constant 0 : index
    %7 = vector.load %arg4[%c0_5, %c0_6] : memref<1x128xf32, #tpu.memory_space<vmem>>, vector<1x128xf32>
    %8 = vector.broadcast %7 : vector<1x128xf32> to vector<128x128xf32>
    %9 = arith.addf %6, %8 : vector<128x128xf32>
    %cst_7 = arith.constant 0.000000e+00 : f32
    %10 = vector.broadcast %cst_7 : f32 to vector<128x128xf32>
    %11 = arith.maximumf %9, %10 : vector<128x128xf32>
    %c0_8 = arith.constant 0 : index
    %c0_9 = arith.constant 0 : index
    %12 = vector.load %arg8[%c0_8, %c0_9] : memref<1x128xf32, #tpu.memory_space<vmem>>, vector<1x128xf32>
    %cst_10 = arith.constant dense<0.000000e+00> : vector<128xf32>
    %13 = vector.multi_reduction <add>, %11, %cst_10 [0] : vector<128x128xf32> to vector<128xf32>
    %14 = vector.shape_cast %13 : vector<128xf32> to vector<1x128xf32>
    %15 = arith.addf %12, %14 : vector<1x128xf32>
    %c0_11 = arith.constant 0 : index
    %c0_12 = arith.constant 0 : index
    %16 = vector.load %arg8[%c0_11, %c0_12] : memref<1x128xf32, #tpu.memory_space<vmem>>, vector<1x128xf32>
    tpu.vector_store %arg8[%c0_11, %c0_12], %15 {strides = array<i32>} : memref<1x128xf32, #tpu.memory_space<vmem>>, vector<1x128xf32>,
    %c0_13 = arith.constant 0 : index
    %c0_14 = arith.constant 0 : index
    %17 = vector.load %arg9[%c0_13, %c0_14] : memref<1x128xf32, #tpu.memory_space<vmem>>, vector<1x128xf32>
    %cst_15 = arith.constant dense<0xFF800000> : vector<128xf32>
    %18 = vector.multi_reduction <maximumf>, %11, %cst_15 [0] : vector<128x128xf32> to vector<128xf32>
    %19 = vector.shape_cast %18 : vector<128xf32> to vector<1x128xf32>
    %20 = arith.maximumf %17, %19 : vector<1x128xf32>
    %c0_16 = arith.constant 0 : index
    %c0_17 = arith.constant 0 : index
    %21 = vector.load %arg9[%c0_16, %c0_17] : memref<1x128xf32, #tpu.memory_space<vmem>>, vector<1x128xf32>
    tpu.vector_store %arg9[%c0_16, %c0_17], %20 {strides = array<i32>} : memref<1x128xf32, #tpu.memory_space<vmem>>, vector<1x128xf32>,
    %c1_i32 = arith.constant 1 : i32
    %22 = arith.cmpi eq, %arg1, %c1_i32 : i32
    %23 = arith.extui %22 : i1 to i32
    %c0_i32_18 = arith.constant 0 : i32
    %24 = arith.cmpi ne, %23, %c0_i32_18 : i32
    scf.if %24 {
      %c0_19 = arith.constant 0 : index
      %c0_20 = arith.constant 0 : index
      %25 = vector.load %arg8[%c0_19, %c0_20] : memref<1x128xf32, #tpu.memory_space<vmem>>, vector<1x128xf32>
      %cst_21 = arith.constant 3.906250e-03 : f32
      %26 = vector.broadcast %cst_21 : f32 to vector<1x128xf32>
      %27 = arith.mulf %25, %26 : vector<1x128xf32>
      %c0_22 = arith.constant 0 : index
      %c0_23 = arith.constant 0 : index
      %28 = vector.load %arg9[%c0_22, %c0_23] : memref<1x128xf32, #tpu.memory_space<vmem>>, vector<1x128xf32>
      %c0_24 = arith.constant 0 : index
      %c0_25 = arith.constant 0 : index
      %29 = vector.load %arg5[%c0_24, %c0_25] : memref<256x128xf32, #tpu.memory_space<vmem>>, vector<128x128xf32>
      %cst_26 = arith.constant dense<0.000000e+00> : vector<1x128xf32>
      %30 = tpu.matmul %27, %29, %cst_26 {dimension_numbers = #tpu.dot_dimension_numbers<[1], [0], [0], [1], [0, 0, 1, 1], [], []>} : vector<1x128xf32>, vector<128x128xf32>, vector<1x128xf32> -> vector<1x128xf32>
      %c128 = arith.constant 128 : index
      %c0_27 = arith.constant 0 : index
      %31 = vector.load %arg5[%c128, %c0_27] : memref<256x128xf32, #tpu.memory_space<vmem>>, vector<128x128xf32>
      %cst_28 = arith.constant dense<0.000000e+00> : vector<1x128xf32>
      %32 = tpu.matmul %28, %31, %cst_28 {dimension_numbers = #tpu.dot_dimension_numbers<[1], [0], [0], [1], [0, 0, 1, 1], [], []>} : vector<1x128xf32>, vector<128x128xf32>, vector<1x128xf32> -> vector<1x128xf32>
      %33 = arith.addf %30, %32 : vector<1x128xf32>
      %c0_29 = arith.constant 0 : index
      %c0_30 = arith.constant 0 : index
      %34 = vector.load %arg6[%c0_29, %c0_30] : memref<1x128xf32, #tpu.memory_space<vmem>>, vector<1x128xf32>
      %35 = arith.addf %33, %34 : vector<1x128xf32>
      %c0_31 = arith.constant 0 : index
      %c0_32 = arith.constant 0 : index
      %c0_33 = arith.constant 0 : index
      %36 = vector.load %arg7[%c0_31, %c0_32, %c0_33] : memref<1x1x128xf32, #tpu.memory_space<vmem>>, vector<1x1x128xf32>
      %37 = vector.shape_cast %36 : vector<1x1x128xf32> to vector<1x128xf32>
      %38 = vector.shape_cast %35 : vector<1x128xf32> to vector<1x1x128xf32>
      tpu.vector_store %arg7[%c0_31, %c0_32, %c0_33], %38 {strides = array<i32>} : memref<1x1x128xf32, #tpu.memory_space<vmem>>, vector<1x1x128xf32>,
    } else {
    }
    return
  }
  func.func @transform_0(%arg0: i32, %arg1: i32) -> (i32, i32, i32) {
    %c0_i32 = arith.constant 0 : i32
    %c0_i32_0 = arith.constant 0 : i32
    return %arg0, %arg1, %c0_i32 : i32, i32, i32
  }
  func.func @transform_1(%arg0: i32, %arg1: i32) -> (i32, i32) {
    %c0_i32 = arith.constant 0 : i32
    %c0_i32_0 = arith.constant 0 : i32
    %c0_i32_1 = arith.constant 0 : i32
    return %c0_i32, %c0_i32_0 : i32, i32
  }
  func.func @transform_2(%arg0: i32, %arg1: i32) -> (i32, i32) {
    %c0_i32 = arith.constant 0 : i32
    %c0_i32_0 = arith.constant 0 : i32
    %c0_i32_1 = arith.constant 0 : i32
    return %c0_i32, %c0_i32_0 : i32, i32
  }
  func.func @transform_3(%arg0: i32, %arg1: i32) -> (i32, i32) {
    %c0_i32 = arith.constant 0 : i32
    %c0_i32_0 = arith.constant 0 : i32
    %c0_i32_1 = arith.constant 0 : i32
    return %c0_i32, %c0_i32_0 : i32, i32
  }
  func.func @transform_4(%arg0: i32, %arg1: i32) -> (i32, i32) {
    %c0_i32 = arith.constant 0 : i32
    %c0_i32_0 = arith.constant 0 : i32
    %c0_i32_1 = arith.constant 0 : i32
    return %c0_i32, %c0_i32_0 : i32, i32
  }
  func.func @transform_5(%arg0: i32, %arg1: i32) -> (i32, i32, i32) {
    %c0_i32 = arith.constant 0 : i32
    %c0_i32_0 = arith.constant 0 : i32
    %c0_i32_1 = arith.constant 0 : i32
    return %arg0, %c0_i32, %c0_i32_0 : i32, i32, i32
  }
}

</mosaic_0001>

<llo_original>
// kernel: tpu_custom_call.1
$region0: #{tpu_custom_call.1}
  #allocation0 [shape = 'u32[]', space=smem, size = 0x4, offset = 0x4, fixed_abs, tag = 'smem constant byte address 0x4 - core index']
  #allocation1 [shape = 'u32[72,128]{1,0:T(1,128)}', space=vmem, size = 0x9000, scoped, tag = 'internal scratch']
  #allocation2 [shape = 'f32[1,128]{1,0:T(1,128)}', space=vmem, size = 0x200, scoped, tag = 'scratch operand']
  #allocation3 [shape = 'f32[1,128]{1,0:T(1,128)}', space=vmem, size = 0x200, scoped, tag = 'scratch operand']
  %s0 = inlined_call_operand.vmem [shape: bf16[2,256,40], index: 0, kind: input, shape index: {}]
  %s1 = inlined_call_operand.vmem [shape: bf16[40,128], index: 1, kind: input, shape index: {}]
  %s2 = inlined_call_operand.vmem [shape: f32[1,128], index: 2, kind: input, shape index: {}]
  %s3 = inlined_call_operand.vmem [shape: f32[256,128], index: 3, kind: input, shape index: {}]
  %s4 = inlined_call_operand.vmem [shape: f32[1,128], index: 4, kind: input, shape index: {}]
  %s5 = inlined_call_operand.hbm [shape: f32[2,1,128], index: 5, kind: output, shape index: {}]
  %s6 = sld [smem:[#allocation0]]
  $region61: #{tpu_custom_call.1} parent=0
    _
  %s8 = ssub.s32 1, %s6
  %s9 = scalar_select 0, %s8, %s6
  $region1: #{tpu_custom_call.1} parent=0
    #allocation4 [shape = 'u8[1024]{0}', space=vmem, size = 0x400, scoped, tag = 'output window, operand 0']
    #allocation5 [shape = 's32[2]{0}', space=sflag, size = 0x8, scoped, tag = 'scoped memory for tpu_custom_call.1']
    %10 = vsyncpa [#allocation5], 0
    %s11 = scalar_lea.sflag [#allocation5], 1
    %12 = vsyncpa %s11, 0
    loop: start=0, step=1, limit=6
    $region2: #{tpu_custom_call.1} parent=1 // loop_pre_header
      _
    $region3: #{tpu_custom_call.1} parent=1 // loop_header
      %s14 = sphi 0, %s18
      %p15 = scmp.ge.s32.totalorder %s14, 6
      %s21 = sphi 0, %s33
      %s22 = sphi 0, %s29
      %s23 = sphi 0, %s21
      %s24 = sphi 0, %s22
      %s25 = sphi 0, %s23
      %s26 = sphi 0, %s24
      %s38 = sphi 0, %s40
      %s41 = sphi 0, %s38
      %s42 = sphi 0, %s41
      %s58 = sphi 0, %s42
      %s62 = sphi 0, %s62
      %s64 = sphi 0, %s62
      %s65 = sphi 0, %s64
      %s79 = sphi 0, %s65
      %s83 = sphi 0, %s83
      %s85 = sphi 0, %s83
      %s86 = sphi 0, %s85
      %s100 = sphi 0, %s86
      %s104 = sphi 0, %s104
      %s106 = sphi 0, %s104
      %s107 = sphi 0, %s106
      %s121 = sphi 0, %s107
      %s125 = sphi 0, %s125
      %s127 = sphi 0, %s125
      %s128 = sphi 0, %s127
      %s142 = sphi 0, %s128
      %s148 = sphi 0, %s150
      %s151 = sphi 0, %s148
      %s152 = sphi 0, %s151
      %s168 = sphi 0, %s152
    $region4: #{tpu_custom_call.1} parent=1 // loop_header_branch
      %17 = sbr.rel (%p15) target = $region8
    $region5: #{tpu_custom_call.1} parent=1 // loop_body
      %s19 = ssub.s32 %s14, 1
      %s20 = ssub.s32 %s14, 2
      %s27 = sadd.s32 1, %s22
      %p28 = scmp.ge.s32.totalorder %s27, 2
      %s29 = scalar_select %p28, 0, %s27
      %s30 = sadd.s32 1, %s21
      %s31 = scalar_select %p28, %s30, %s21
      %p32 = scmp.ge.s32.totalorder %s31, 2
      %s33 = scalar_select %p32, 0, %s31
      %s34 = ssub.s32 %s21, %s33
      %s35 = ssub.s32 %s22, %s29
      %s36 = sor.u32 %s34, %s35
      %p37 = scmp.eq.s32.totalorder %s36, 0
      %s39 = sadd.s32 %s38, 1
      %s40 = scalar_select %p37, %s38, %s39
      %p43 = pneg %p37
      %p44 = scmp.eq.s32.totalorder %s14, 3
      %p45 = por %p43, %p44
      %p46 = scmp.ne.s32.totalorder %s38, %s41
      %p47 = scmp.eq.s32.totalorder %s14, 0
      %p48 = por %p46, %p47
      %p49 = scmp.ne.s32.totalorder %s38, %s41
      %p50 = scmp.eq.s32.totalorder %s19, 3
      %p51 = por %p49, %p50
      %p52 = scmp.ne.s32.totalorder %s41, %s42
      %p53 = scmp.eq.s32.totalorder %s19, 0
      %p54 = por %p52, %p53
      %p55 = scmp.ne.s32.totalorder %s41, %s42
      %p56 = scmp.eq.s32.totalorder %s20, 3
      %p57 = por %p55, %p56
      %p59 = scmp.ne.s32.totalorder %s42, %s58
      %p60 = scmp.eq.s32.totalorder %s20, 0
      %p61 = por %p59, %p60
      %s63 = sadd.s32 %s62, 1
      %p66 = scmp.eq.s32.totalorder %s14, 3
      %p67 = scmp.ne.s32.totalorder %s62, %s64
      %p68 = scmp.eq.s32.totalorder %s14, 0
      %p69 = por %p67, %p68
      %p70 = scmp.ne.s32.totalorder %s62, %s64
      %p71 = scmp.eq.s32.totalorder %s19, 3
      %p72 = por %p70, %p71
      %p73 = scmp.ne.s32.totalorder %s64, %s65
      %p74 = scmp.eq.s32.totalorder %s19, 0
      %p75 = por %p73, %p74
      %p76 = scmp.ne.s32.totalorder %s64, %s65
      %p77 = scmp.eq.s32.totalorder %s20, 3
      %p78 = por %p76, %p77
      %p80 = scmp.ne.s32.totalorder %s65, %s79
      %p81 = scmp.eq.s32.totalorder %s20, 0
      %p82 = por %p80, %p81
      %s84 = sadd.s32 %s83, 1
      %p87 = scmp.eq.s32.totalorder %s14, 3
      %p88 = scmp.ne.s32.totalorder %s83, %s85
      %p89 = scmp.eq.s32.totalorder %s14, 0
      %p90 = por %p88, %p89
      %p91 = scmp.ne.s32.totalorder %s83, %s85
      %p92 = scmp.eq.s32.totalorder %s19, 3
      %p93 = por %p91, %p92
      %p94 = scmp.ne.s32.totalorder %s85, %s86
      %p95 = scmp.eq.s32.totalorder %s19, 0
      %p96 = por %p94, %p95
      %p97 = scmp.ne.s32.totalorder %s85, %s86
      %p98 = scmp.eq.s32.totalorder %s20, 3
      %p99 = por %p97, %p98
      %p101 = scmp.ne.s32.totalorder %s86, %s100
      %p102 = scmp.eq.s32.totalorder %s20, 0
      %p103 = por %p101, %p102
      %s105 = sadd.s32 %s104, 1
      %p108 = scmp.eq.s32.totalorder %s14, 3
      %p109 = scmp.ne.s32.totalorder %s104, %s106
      %p110 = scmp.eq.s32.totalorder %s14, 0
      %p111 = por %p109, %p110
      %p112 = scmp.ne.s32.totalorder %s104, %s106
      %p113 = scmp.eq.s32.totalorder %s19, 3
      %p114 = por %p112, %p113
      %p115 = scmp.ne.s32.totalorder %s106, %s107
      %p116 = scmp.eq.s32.totalorder %s19, 0
      %p117 = por %p115, %p116
      %p118 = scmp.ne.s32.totalorder %s106, %s107
      %p119 = scmp.eq.s32.totalorder %s20, 3
      %p120 = por %p118, %p119
      %p122 = scmp.ne.s32.totalorder %s107, %s121
      %p123 = scmp.eq.s32.totalorder %s20, 0
      %p124 = por %p122, %p123
      %s126 = sadd.s32 %s125, 1
      %p129 = scmp.eq.s32.totalorder %s14, 3
      %p130 = scmp.ne.s32.totalorder %s125, %s127
      %p131 = scmp.eq.s32.totalorder %s14, 0
      %p132 = por %p130, %p131
      %p133 = scmp.ne.s32.totalorder %s125, %s127
      %p134 = scmp.eq.s32.totalorder %s19, 3
      %p135 = por %p133, %p134
      %p136 = scmp.ne.s32.totalorder %s127, %s128
      %p137 = scmp.eq.s32.totalorder %s19, 0
      %p138 = por %p136, %p137
      %p139 = scmp.ne.s32.totalorder %s127, %s128
      %p140 = scmp.eq.s32.totalorder %s20, 3
      %p141 = por %p139, %p140
      %p143 = scmp.ne.s32.totalorder %s128, %s142
      %p144 = scmp.eq.s32.totalorder %s20, 0
      %p145 = por %p143, %p144
      %s146 = ssub.s32 %s21, %s33
      %p147 = scmp.eq.s32.totalorder %s146, 0
      %s149 = sadd.s32 %s148, 1
      %s150 = scalar_select %p147, %s148, %s149
      %p153 = pneg %p147
      %p154 = scmp.eq.s32.totalorder %s14, 3
      %p155 = por %p153, %p154
      %p156 = scmp.ne.s32.totalorder %s148, %s151
      %p157 = scmp.eq.s32.totalorder %s14, 0
      %p158 = por %p156, %p157
      %p159 = scmp.ne.s32.totalorder %s148, %s151
      %p160 = scmp.eq.s32.totalorder %s19, 3
      %p161 = por %p159, %p160
      %p162 = scmp.ne.s32.totalorder %s151, %s152
      %p163 = scmp.eq.s32.totalorder %s19, 0
      %p164 = por %p162, %p163
      %p165 = scmp.ne.s32.totalorder %s151, %s152
      %p166 = scmp.eq.s32.totalorder %s20, 3
      %p167 = por %p165, %p166
      %p169 = scmp.ne.s32.totalorder %s152, %s168
      %p170 = scmp.eq.s32.totalorder %s20, 0
      %p171 = por %p169, %p170
      %p172 = scmp.le.s32.totalorder 1, %s14
      %p173 = scmp.lt.s32.totalorder %s14, 5
      %p174 = pnand %p172, %p173
      %p175 = pneg %p174
      // Predicated region
      $region9: #{tpu_custom_call.1} parent=5 // pred_check
        _
      $region10: #{tpu_custom_call.1} parent=5 // pred_check_branch
        %177 = sbr.rel (%p174) target = $region12
      $region11: #{tpu_custom_call.1} parent=5 // pred_region
        %s178 = ssub.s32 %s14, 1
        // Predicated region
        $region13: #{tpu_custom_call.1} parent=11 // pred_check
          %p179 = pneg %p75
        $region14: #{tpu_custom_call.1} parent=11 // pred_check_branch
          %181 = sbr.rel (%p179) target = $region16
        $region15: #{tpu_custom_call.1} parent=11 // pred_region
          _
        $region16: #{tpu_custom_call.1} parent=11 // pred_fallthru
          _
        // Predicated region
        $region17: #{tpu_custom_call.1} parent=11 // pred_check
          %p182 = pneg %p96
        $region18: #{tpu_custom_call.1} parent=11 // pred_check_branch
          %184 = sbr.rel (%p182) target = $region20
        $region19: #{tpu_custom_call.1} parent=11 // pred_region
          _
        $region20: #{tpu_custom_call.1} parent=11 // pred_fallthru
          _
        // Predicated region
        $region21: #{tpu_custom_call.1} parent=11 // pred_check
          %p185 = pneg %p117
        $region22: #{tpu_custom_call.1} parent=11 // pred_check_branch
          %187 = sbr.rel (%p185) target = $region24
        $region23: #{tpu_custom_call.1} parent=11 // pred_region
          _
        $region24: #{tpu_custom_call.1} parent=11 // pred_fallthru
          _
        // Predicated region
        $region25: #{tpu_custom_call.1} parent=11 // pred_check
          %p188 = pneg %p138
        $region26: #{tpu_custom_call.1} parent=11 // pred_check_branch
          %190 = sbr.rel (%p188) target = $region28
        $region27: #{tpu_custom_call.1} parent=11 // pred_region
          _
        $region28: #{tpu_custom_call.1} parent=11 // pred_fallthru
          _
      $region12: #{tpu_custom_call.1} parent=5 // pred_fallthru
        _
      %p191 = scmp.lt.s32.totalorder %s14, 4
      // Predicated region
      $region29: #{tpu_custom_call.1} parent=5 // pred_check
        %p192 = pneg %p191
      $region30: #{tpu_custom_call.1} parent=5 // pred_check_branch
        %194 = sbr.rel (%p192) target = $region32
      $region31: #{tpu_custom_call.1} parent=5 // pred_region
        // Predicated region
        $region33: #{tpu_custom_call.1} parent=31 // pred_check
          %p195 = pneg %p48
        $region34: #{tpu_custom_call.1} parent=31 // pred_check_branch
          %197 = sbr.rel (%p195) target = $region36
        $region35: #{tpu_custom_call.1} parent=31 // pred_region
          %s198 = smul.u32 16, %s22
          %p199 = scmp.lt.s32.totalorder %s21, 1
          %s200 = scalar_select %p199, %s21, 1
          %p201 = scmp.lt.s32.totalorder %s198, 31
          %s202 = scalar_select %p201, %s198, 31
          %s203 = smul.addr %s200, 32
          %s204 = sadd.s32 %s202, %s203
          %s205 = smul.addr %s204, 4
          %s206 = scalar_lea.vmem %s0, %s205
          %s207 = smul.u32 16, %s22
        $region36: #{tpu_custom_call.1} parent=31 // pred_fallthru
          _
      $region32: #{tpu_custom_call.1} parent=5 // pred_fallthru
        _
      %p208 = scmp.le.s32.totalorder 1, %s14
      %p209 = scmp.lt.s32.totalorder %s14, 5
      %p210 = pnand %p208, %p209
      %p211 = pneg %p210
      // Predicated region
      $region37: #{tpu_custom_call.1} parent=5 // pred_check
        _
      $region38: #{tpu_custom_call.1} parent=5 // pred_check_branch
        %213 = sbr.rel (%p210) target = $region40
      $region39: #{tpu_custom_call.1} parent=5 // pred_region
        %s214 = ssub.s32 %s14, 1
        %s215 = smul.u32 16, %s24
        %p216 = scmp.lt.s32.totalorder %s23, 1
        %s217 = scalar_select %p216, %s23, 1
        %p218 = scmp.lt.s32.totalorder %s215, 31
        %s219 = scalar_select %p218, %s215, 31
        %s220 = smul.addr %s217, 32
        %s221 = sadd.s32 %s219, %s220
        %s222 = smul.addr %s221, 4
        %s223 = scalar_lea.vmem %s0, %s222
        %p224 = pneg %p54
        %p225 = pneg %p51
        %p226 = pneg %p75
        %p227 = pneg %p72
        %p228 = pneg %p96
        %p229 = pneg %p93
        %p230 = pneg %p117
        %p231 = pneg %p114
        %p232 = pneg %p138
        %p233 = pneg %p135
        %p234 = pneg %p164
        %p235 = pneg %p161
        %s236 = sand.u32 %s151, 1
        %s237 = scalar_lea.sflag [#allocation5], %s236
        %s238 = sand.u32 %s151, 1
        %s239 = scalar_lea.vmem [#allocation4], %s238
        %s240 = smul.u32 16, %s24
        %p241 = scmp.lt.s32.totalorder %s23, 1
        %s242 = scalar_select %p241, %s23, 1
        %p243 = scmp.lt.s32.totalorder %s240, 31
        %s244 = scalar_select %p243, %s240, 31
        %s245 = smul.addr %s242, 32
        %s246 = sadd.s32 %s244, %s245
        %s247 = smul.addr %s246, 4
        %s248 = scalar_lea.vmem %s0, %s247
        %s249 = smul.u32 16, %s24
        %p251 = scmp.eq.s32.totalorder %s24, 0
        // Predicated region
        $region41: #{tpu_custom_call.1} parent=39 // pred_check
          %p252 = pneg %p251
        $region42: #{tpu_custom_call.1} parent=39 // pred_check_branch
          %254 = sbr.rel (%p252) target = $region44
        $region43: #{tpu_custom_call.1} parent=39 // pred_region
          %255 = vst [vmem:[#allocation2] sm:$0x1] 0.0
          %256 = vst [vmem:[#allocation3] sm:$0x1] -inf
        $region44: #{tpu_custom_call.1} parent=39 // pred_fallthru
          _
        %v257 = vld [vmem:[%s248] sm:$0xf]
        %v258 = vld [vmem:[%s248 + $0x4] sm:$0xf]
        %v259 = vld [vmem:[%s248 + $0x8] sm:$0xf]
        %v260 = vld [vmem:[%s248 + $0xc] sm:$0xf]
        %v261 = vld [vmem:[%s248 + $0x10] sm:$0xf]
        %v262 = vld [vmem:[%s248 + $0x14] sm:$0xf]
        %v263 = vld [vmem:[%s248 + $0x18] sm:$0xf]
        %v264 = vld [vmem:[%s248 + $0x1c] sm:$0xf]
        %v265 = vld [vmem:[%s248 + $0x20] sm:$0xf]
        %v266 = vld [vmem:[%s248 + $0x24] sm:$0xf]
        %v267 = vld [vmem:[%s248 + $0x28] sm:$0xf]
        %v268 = vld [vmem:[%s248 + $0x2c] sm:$0xf]
        %v269 = vld [vmem:[%s248 + $0x30] sm:$0xf]
        %v270 = vld [vmem:[%s248 + $0x34] sm:$0xf]
        %v271 = vld [vmem:[%s248 + $0x38] sm:$0xf]
        %v272 = vld [vmem:[%s248 + $0x3c] sm:$0xf]
        %v273 = vld [vmem:[%s1] sm:$0xf]
        %v274 = vld [vmem:[%s1 + $0x4] sm:$0xf]
        %v275 = vld [vmem:[%s1 + $0x8] sm:$0xf]
        %v276 = vld [vmem:[%s1 + $0xc] sm:$0xf]
        %v277 = vld [vmem:[%s1 + $0x10] sm:$0xf]
        %v278 = vld [vmem:[%s2] sm:$0x1]
        %v280 = vperm.slane %v278, 0
        %v298 = vunpack.c.l.b16 %v257
        %v299 = vunpack.c.l.b16 %v258
        %v300 = vunpack.c.l.b16 %v259
        %v301 = vunpack.c.l.b16 %v260
        %v302 = vunpack.c.l.b16 %v261
        %v303 = vunpack.c.l.b16 %v262
        %v304 = vunpack.c.l.b16 %v263
        %v305 = vunpack.c.l.b16 %v264
        %v306 = vunpack.c.l.b16 %v265
        %v307 = vunpack.c.l.b16 %v266
        %v308 = vunpack.c.l.b16 %v267
        %v309 = vunpack.c.l.b16 %v268
        %v310 = vunpack.c.l.b16 %v269
        %v311 = vunpack.c.l.b16 %v270
        %v312 = vunpack.c.l.b16 %v271
        %v313 = vunpack.c.l.b16 %v272
        %v314 = vpack.c.b16 %v299, %v298
        %v315 = vpack.c.b16 %v301, %v300
        %v316 = vpack.c.b16 %v303, %v302
        %v317 = vpack.c.b16 %v305, %v304
        %v318 = vpack.c.b16 %v307, %v306
        %v319 = vpack.c.b16 %v309, %v308
        %v320 = vpack.c.b16 %v311, %v310
        %v321 = vpack.c.b16 %v313, %v312
        %v327 = vunpack.c.l.b16 %v273
        %v328 = vunpack.c.l.b16 %v274
        %v329 = vunpack.c.l.b16 %v275
        %v330 = vunpack.c.l.b16 %v276
        %v331 = vunpack.c.l.b16 %v277
        %v332 = vpack.c.b16 %v328, %v327
        %v333 = vpack.c.b16 %v330, %v329
        %v334 = vpack.c.b16 %v331, %v331
        %vm337 = vcmask 326656
        %v339 = vsel %vm337, %v314, 0
        %v342 = vsel %vm337, %v315, 0
        %v345 = vsel %vm337, %v316, 0
        %v348 = vsel %vm337, %v317, 0
        %v351 = vsel %vm337, %v318, 0
        %v354 = vsel %vm337, %v319, 0
        %v357 = vsel %vm337, %v320, 0
        %v360 = vsel %vm337, %v321, 0
        %vm362 = vcmask 1043456
        %v364 = vsel %vm362, %v334, 0
        %366 = vmatpush.bf16.msra.mxu0 0
        %367 = vmatpush.bf16.msra.mxu0 0
        %368 = vmatpush.bf16.msra.mxu0 0
        %369 = vmatpush.bf16.msra.mxu0 0
        %370 = vmatpush.bf16.msra.mxu0 0
        %371 = vmatpush.bf16.msra.mxu0 %v364
        %372 = vmatpush.bf16.msra.mxu0 %v333
        %373 = vmatpush.bf16.msra.mxu0 %v332
        %374 = vmatmul.bf16.gmra.mxu0 %v339
        %v375 = vpop.f32.mrf.mxu0
        %v376 = vadd.f32 %v280, %v375
        %v377 = vpop.f32.mrf.mxu0
        %v378 = vadd.f32 %v280, %v377
        %379 = vmatmul.bf16.gmra.mxu0 %v342
        %v380 = vpop.f32.mrf.mxu0
        %v381 = vadd.f32 %v280, %v380
        %v382 = vpop.f32.mrf.mxu0
        %v383 = vadd.f32 %v280, %v382
        %384 = vmatmul.bf16.gmra.mxu0 %v345
        %v385 = vpop.f32.mrf.mxu0
        %v386 = vadd.f32 %v280, %v385
        %v387 = vpop.f32.mrf.mxu0
        %v388 = vadd.f32 %v280, %v387
        %389 = vmatmul.bf16.gmra.mxu0 %v348
        %v390 = vpop.f32.mrf.mxu0
        %v391 = vadd.f32 %v280, %v390
        %v392 = vpop.f32.mrf.mxu0
        %v393 = vadd.f32 %v280, %v392
        %394 = vmatmul.bf16.gmra.mxu0 %v351
        %v395 = vpop.f32.mrf.mxu0
        %v396 = vadd.f32 %v280, %v395
        %v397 = vpop.f32.mrf.mxu0
        %v398 = vadd.f32 %v280, %v397
        %399 = vmatmul.bf16.gmra.mxu0 %v354
        %v400 = vpop.f32.mrf.mxu0
        %v401 = vadd.f32 %v280, %v400
        %v402 = vpop.f32.mrf.mxu0
        %v403 = vadd.f32 %v280, %v402
        %404 = vmatmul.bf16.gmra.mxu0 %v357
        %v405 = vpop.f32.mrf.mxu0
        %v406 = vadd.f32 %v280, %v405
        %v407 = vpop.f32.mrf.mxu0
        %v408 = vadd.f32 %v280, %v407
        %409 = vmatmul.bf16.gmra.mxu0 %v360
        %v410 = vpop.f32.mrf.mxu0
        %v411 = vadd.f32 %v280, %v410
        %v412 = vpop.f32.mrf.mxu0
        %v413 = vadd.f32 %v280, %v412
        %414 = vdwg.mxu0
        %v415 = vmax.f32 %v376, 0.0
        %v416 = vmax.f32 %v378, 0.0
        %v417 = vmax.f32 %v381, 0.0
        %v418 = vmax.f32 %v383, 0.0
        %v419 = vmax.f32 %v386, 0.0
        %v420 = vmax.f32 %v388, 0.0
        %v421 = vmax.f32 %v391, 0.0
        %v422 = vmax.f32 %v393, 0.0
        %v423 = vmax.f32 %v396, 0.0
        %v424 = vmax.f32 %v398, 0.0
        %v425 = vmax.f32 %v401, 0.0
        %v426 = vmax.f32 %v403, 0.0
        %v427 = vmax.f32 %v406, 0.0
        %v428 = vmax.f32 %v408, 0.0
        %v429 = vmax.f32 %v411, 0.0
        %v430 = vmax.f32 %v413, 0.0
        %v431 = vld [vmem:[#allocation2] sm:$0x1]
        %v432 = vadd.f32 %v415, %v416
        %v433 = vadd.f32 %v432, %v417
        %v434 = vadd.f32 %v433, %v418
        %v435 = vadd.f32 %v434, %v419
        %v436 = vadd.f32 %v435, %v420
        %v437 = vadd.f32 %v436, %v421
        %v438 = vadd.f32 %v437, %v422
        %v439 = vadd.f32 %v438, %v423
        %v440 = vadd.f32 %v439, %v424
        %v441 = vadd.f32 %v440, %v425
        %v442 = vadd.f32 %v441, %v426
        %v443 = vadd.f32 %v442, %v427
        %v444 = vadd.f32 %v443, %v428
        %v445 = vadd.f32 %v444, %v429
        %v446 = vadd.f32 %v445, %v430
        %v447 = vrot.slane %v446, 4
        %v448 = vadd.f32 %v446, %v447
        %v449 = vrot.slane %v448, 2
        %v450 = vadd.f32 %v448, %v449
        %v451 = vrot.slane %v450, 1
        %v452 = vadd.f32 %v450, %v451
        %v453 = vadd.f32 %v431, %v452
        %454 = vst [vmem:[#allocation2] sm:$0x1] %v453
        %v455 = vld [vmem:[#allocation3] sm:$0x1]
        %v456 = vmax.f32 %v415, %v419
        %v457 = vmax.f32 %v416, %v420
        %v458 = vmax.f32 %v417, %v421
        %v459 = vmax.f32 %v418, %v422
        %v460 = vmax.f32 %v456, %v423
        %v461 = vmax.f32 %v457, %v424
        %v462 = vmax.f32 %v458, %v425
        %v463 = vmax.f32 %v459, %v426
        %v464 = vmax.f32 %v460, %v427
        %v465 = vmax.f32 %v461, %v428
        %v466 = vmax.f32 %v462, %v429
        %v467 = vmax.f32 %v463, %v430
        %v468 = vmax.f32 %v464, %v465
        %v469 = vmax.f32 %v466, %v467
        %v470 = vmax.f32 %v468, %v469
        %v471 = vrot.slane %v470, 4
        %v472 = vmax.f32 %v470, %v471
        %v473 = vrot.slane %v472, 2
        %v474 = vmax.f32 %v472, %v473
        %v475 = vrot.slane %v474, 1
        %v476 = vmax.f32 %v474, %v475
        %v477 = vmax.f32 %v455, %v476
        %478 = vst [vmem:[#allocation3] sm:$0x1] %v477
        %p479 = scmp.eq.s32.totalorder %s24, 1
        // Predicated region
        $region45: #{tpu_custom_call.1} parent=39 // pred_check
          %p480 = pneg %p479
        $region46: #{tpu_custom_call.1} parent=39 // pred_check_branch
          %482 = sbr.rel (%p480) target = $region48
        $region47: #{tpu_custom_call.1} parent=39 // pred_region
          %v483 = vld [vmem:[#allocation2] sm:$0x1]
          %v484 = vmul.f32 %v483, 0.00390625
          %v485 = vld [vmem:[#allocation3] sm:$0x1]
          %v486 = vld [vmem:[%s3] sm:$0xff]
          %v487 = vld [vmem:[%s3 + $0x8] sm:$0xff]
          %v488 = vld [vmem:[%s3 + $0x10] sm:$0xff]
          %v489 = vld [vmem:[%s3 + $0x18] sm:$0xff]
          %v490 = vld [vmem:[%s3 + $0x20] sm:$0xff]
          %v491 = vld [vmem:[%s3 + $0x28] sm:$0xff]
          %v492 = vld [vmem:[%s3 + $0x30] sm:$0xff]
          %v493 = vld [vmem:[%s3 + $0x38] sm:$0xff]
          %v494 = vld [vmem:[%s3 + $0x40] sm:$0xff]
          %v495 = vld [vmem:[%s3 + $0x48] sm:$0xff]
          %v496 = vld [vmem:[%s3 + $0x50] sm:$0xff]
          %v497 = vld [vmem:[%s3 + $0x58] sm:$0xff]
          %v498 = vld [vmem:[%s3 + $0x60] sm:$0xff]
          %v499 = vld [vmem:[%s3 + $0x68] sm:$0xff]
          %v500 = vld [vmem:[%s3 + $0x70] sm:$0xff]
          %v501 = vld [vmem:[%s3 + $0x78] sm:$0xff]
          %v502 = vld [vmem:[%s3 + $0x80] sm:$0xff]
          %v503 = vld [vmem:[%s3 + $0x88] sm:$0xff]
          %v504 = vld [vmem:[%s3 + $0x90] sm:$0xff]
          %v505 = vld [vmem:[%s3 + $0x98] sm:$0xff]
          %v506 = vld [vmem:[%s3 + $0xa0] sm:$0xff]
          %v507 = vld [vmem:[%s3 + $0xa8] sm:$0xff]
          %v508 = vld [vmem:[%s3 + $0xb0] sm:$0xff]
          %v509 = vld [vmem:[%s3 + $0xb8] sm:$0xff]
          %v510 = vld [vmem:[%s3 + $0xc0] sm:$0xff]
          %v511 = vld [vmem:[%s3 + $0xc8] sm:$0xff]
          %v512 = vld [vmem:[%s3 + $0xd0] sm:$0xff]
          %v513 = vld [vmem:[%s3 + $0xd8] sm:$0xff]
          %v514 = vld [vmem:[%s3 + $0xe0] sm:$0xff]
          %v515 = vld [vmem:[%s3 + $0xe8] sm:$0xff]
          %v516 = vld [vmem:[%s3 + $0xf0] sm:$0xff]
          %v517 = vld [vmem:[%s3 + $0xf8] sm:$0xff]
          %518 = vmatpush.msra.mxu0 %v517
          %519 = vmatpush.msra.mxu0 %v516
          %520 = vmatpush.msra.mxu0 %v515
          %521 = vmatpush.msra.mxu0 %v514
          %522 = vmatpush.msra.mxu0 %v513
          %523 = vmatpush.msra.mxu0 %v512
          %524 = vmatpush.msra.mxu0 %v511
          %525 = vmatpush.msra.mxu0 %v510
          %526 = vmatpush.msra.mxu0 %v509
          %527 = vmatpush.msra.mxu0 %v508
          %528 = vmatpush.msra.mxu0 %v507
          %529 = vmatpush.msra.mxu0 %v506
          %530 = vmatpush.msra.mxu0 %v505
          %531 = vmatpush.msra.mxu0 %v504
          %532 = vmatpush.msra.mxu0 %v503
          %533 = vmatpush.msra.mxu0 %v502
          %534 = vmatmul.f32.gmra.mxu0 %v485
          %v535 = vpop.f32.mrf.mxu0
          %v536 = vadd.f32 0.0, %v535
          %537 = vdwg.mxu0
          %538 = vmatpush.msra.mxu0 %v501
          %539 = vmatpush.msra.mxu0 %v500
          %540 = vmatpush.msra.mxu0 %v499
          %541 = vmatpush.msra.mxu0 %v498
          %542 = vmatpush.msra.mxu0 %v497
          %543 = vmatpush.msra.mxu0 %v496
          %544 = vmatpush.msra.mxu0 %v495
          %545 = vmatpush.msra.mxu0 %v494
          %546 = vmatpush.msra.mxu0 %v493
          %547 = vmatpush.msra.mxu0 %v492
          %548 = vmatpush.msra.mxu0 %v491
          %549 = vmatpush.msra.mxu0 %v490
          %550 = vmatpush.msra.mxu0 %v489
          %551 = vmatpush.msra.mxu0 %v488
          %552 = vmatpush.msra.mxu0 %v487
          %553 = vmatpush.msra.mxu0 %v486
          %554 = vmatmul.f32.gmra.mxu0 %v484
          %v555 = vpop.f32.mrf.mxu0
          %v556 = vadd.f32 %v536, %v555
          %557 = vdwg.mxu0
          %v558 = vld [vmem:[%s4] sm:$0x1]
          %v559 = vadd.f32 %v556, %v558
          %560 = vst [vmem:[%s239] sm:$0x1] %v559
        $region48: #{tpu_custom_call.1} parent=39 // pred_fallthru
          _
        %s561 = sand.u32 %s151, 1
        %s562 = scalar_lea.sflag [#allocation5], %s561
        %s563 = sand.u32 %s151, 1
        %s564 = scalar_lea.vmem [#allocation4], %s563
        // Predicated region
        $region49: #{tpu_custom_call.1} parent=39 // pred_check
          %p565 = pneg %p161
        $region50: #{tpu_custom_call.1} parent=39 // pred_check_branch
          %567 = sbr.rel (%p565) target = $region52
        $region51: #{tpu_custom_call.1} parent=39 // pred_region
          %569 = vsyncadd %s562, 0
          %s570 = scalar_lea.hbm %s5, %s23
          %s572 = sshll.u32 %s564, 4
          %s573 = int_to_ptr.vmem [resolvable:$true] %s572
          %s574 = sshll.u32 %s570, 4
          %s575 = int_to_ptr.hbm [resolvable:$true] %s574
          %577 = dma.vmem_to_hbm [thread:$0]  %s573, 16, %s575, %s562
        $region52: #{tpu_custom_call.1} parent=39 // pred_fallthru
          _
      $region40: #{tpu_custom_call.1} parent=5 // pred_fallthru
        _
      %p578 = scmp.le.s32.totalorder 2, %s14
      // Predicated region
      $region53: #{tpu_custom_call.1} parent=5 // pred_check
        %p579 = pneg %p578
      $region54: #{tpu_custom_call.1} parent=5 // pred_check_branch
        %581 = sbr.rel (%p579) target = $region56
      $region55: #{tpu_custom_call.1} parent=5 // pred_region
        %s582 = ssub.s32 %s14, 2
        // Predicated region
        $region57: #{tpu_custom_call.1} parent=55 // pred_check
          %p583 = pneg %p167
        $region58: #{tpu_custom_call.1} parent=55 // pred_check_branch
          %585 = sbr.rel (%p583) target = $region60
        $region59: #{tpu_custom_call.1} parent=55 // pred_region
          %s586 = sand.u32 %s152, 1
          %s587 = scalar_lea.sflag [#allocation5], %s586
          %s588 = sand.u32 %s152, 1
          %s589 = scalar_lea.vmem [#allocation4], %s588
          %591 = dma.done %s587, 16
        $region60: #{tpu_custom_call.1} parent=55 // pred_fallthru
          _
      $region56: #{tpu_custom_call.1} parent=5 // pred_fallthru
        _
    $region6: #{tpu_custom_call.1} parent=1 // loop_footer
      %s18 = sadd.s32 1, %s14
    $region7: #{tpu_custom_call.1} parent=1 // loop_footer_branch
      %13 = sbr.rel target = $region3
    $region8: #{tpu_custom_call.1} parent=1 // loop_exit
      _
    %592 = vsyncpa [#allocation5], 1
    %s593 = scalar_lea.sflag [#allocation5], 1
    %594 = vsyncpa %s593, 1

</llo_original>
